<compile_context>
chip_gen: v7x
topology: tpu7x:2x2x1
jax: 0.10.0
libtpu: 0.0.40
codegen_flags: <defaults>
</compile_context>

<pallas_src>
import functools

import jax
import jax.numpy as jnp
from jax.experimental import pallas as pl
from jax.experimental.pallas import tpu as pltpu


HIDDEN = 64          # logical hidden width of the PyTorch module
PAD = 128            # lane-padded width used inside the kernel
BN_EPS = 1e-5
_MXU_STATS_MIN_B = 512   # batch size above which BN sums go to the MXU

# Row indices of the small-parameter block appended to the weight slab.
_ROW_B1, _ROW_G1, _ROW_BE1 = 0, 1, 2
_ROW_B2, _ROW_G2, _ROW_BE2 = 3, 4, 5
_ROW_B3 = 6
_N_PROWS = 8


# ---------------------------------------------------------------------------
# In-kernel helpers
# ---------------------------------------------------------------------------
def _slab_views(slab_ref, obs_pad):
    """Slice the packed slab: w1 | w2 | w3 | param rows (all 128-lane)."""
    w1 = slab_ref[0:obs_pad, :]                                   # (obs_pad, 128) bf16
    w2 = slab_ref[obs_pad:obs_pad + PAD, :]                       # (128, 128)     bf16
    w3 = slab_ref[obs_pad + PAD:obs_pad + 2 * PAD, :]             # (128, 128)     bf16
    pstart = obs_pad + 2 * PAD
    # Single 8-row load; individual rows are selected in-vreg below.
    p = slab_ref[pstart:pstart + _N_PROWS, :].astype(jnp.float32)  # (8, 128) f32
    return w1, w2, w3, p


def _load_padded_x(x_ref, xpad_ref, obs_dim, obs_pad):
    """Zero-extend x to obs_pad lanes inside the kernel (no wrapper pad op)."""
    if obs_dim == obs_pad:
        return x_ref[...]
    xpad_ref[...] = jnp.zeros_like(xpad_ref)
    xpad_ref[:, 0:obs_dim] = x_ref[...]
    return xpad_ref[...]


# ---------------------------------------------------------------------------
# Kernels
# ---------------------------------------------------------------------------
def _actor_kernel_bn(x_ref, slab_ref, o_ref, xpad_ref, *, obs_dim, obs_pad):
    """Batch > 1: fc1 -> BN1 -> relu -> fc2 -> BN2 -> relu -> fc3 -> tanh.

    All feature dims are padded to 128 lanes; padded columns stay exactly zero
    (zero weight cols, zero gamma/beta/bias pads).
    """
    batch = x_ref.shape[0]
    inv_b = 1.0 / batch
    use_mxu_stats = batch >= _MXU_STATS_MIN_B

    x = _load_padded_x(x_ref, xpad_ref, obs_dim, obs_pad)          # (B, obs_pad) f32
    w1, w2, w3, p = _slab_views(slab_ref, obs_pad)

    g1, be1 = p[_ROW_G1:_ROW_G1 + 1, :], p[_ROW_BE1:_ROW_BE1 + 1, :]
    g2, be2 = p[_ROW_G2:_ROW_G2 + 1, :], p[_ROW_BE2:_ROW_BE2 + 1, :]
    b3 = p[_ROW_B3:_ROW_B3 + 1, :]

    # Hoisted once (broadcast_in_dim is not CSE'd if placed inside bn_relu).
    ones_row = jnp.ones((1, batch), jnp.float32) if use_mxu_stats else None

    def bn_relu(h, gamma, beta):
        # One-pass biased batch statistics: var = E[h^2] - mu^2 (clamped >= 0).
        if use_mxu_stats:
            # Column sums on the MXU: one (1,B) x (B,256) matmul for both stats.
            hh = jnp.concatenate([h, h * h], axis=-1)              # (B, 256)
            s = jnp.dot(ones_row, hh, preferred_element_type=jnp.float32)
            mu = s[:, :PAD] * inv_b
            msq = s[:, PAD:] * inv_b
        else:
            mu = jnp.mean(h, axis=0, keepdims=True)
            msq = jnp.mean(h * h, axis=0, keepdims=True)
        var = jnp.maximum(msq - mu * mu, 0.0)
        inv = jax.lax.rsqrt(var + BN_EPS)
        # Fold normalize + affine into one scale/shift (tiny (1,128) math),
        # then a single fused multiply-add over the (B,128) activations.
        scale = gamma * inv
        shift = beta - mu * scale
        return jnp.maximum(h * scale + shift, 0.0)

    # fc1/fc2 biases are skipped on the BN path: BatchNorm(h + b) == BatchNorm(h).
    h = jnp.dot(x.astype(jnp.bfloat16), w1, preferred_element_type=jnp.float32)
    h = bn_relu(h, g1, be1)

    h = jnp.dot(h.astype(jnp.bfloat16), w2, preferred_element_type=jnp.float32)
    h = bn_relu(h, g2, be2)

    o = jnp.dot(h.astype(jnp.bfloat16), w3, preferred_element_type=jnp.float32) + b3
    o_ref[...] = jnp.tanh(o)


def _actor_kernel_nobn(x_ref, slab_ref, o_ref, xpad_ref, *, obs_dim, obs_pad):
    """Batch == 1: fc1 -> relu -> fc2 -> relu -> fc3 (no BN, no tanh)."""
    x = _load_padded_x(x_ref, xpad_ref, obs_dim, obs_pad)
    w1, w2, w3, p = _slab_views(slab_ref, obs_pad)

    b1 = p[_ROW_B1:_ROW_B1 + 1, :]
    b2 = p[_ROW_B2:_ROW_B2 + 1, :]
    b3 = p[_ROW_B3:_ROW_B3 + 1, :]

    h = jnp.dot(x.astype(jnp.bfloat16), w1, preferred_element_type=jnp.float32)
    h = jnp.maximum(h + b1, 0.0)
    h = jnp.dot(h.astype(jnp.bfloat16), w2, preferred_element_type=jnp.float32)
    h = jnp.maximum(h + b2, 0.0)
    o_ref[...] = jnp.dot(h.astype(jnp.bfloat16), w3,
                         preferred_element_type=jnp.float32) + b3


# ---------------------------------------------------------------------------
# Parameter init / packing (done once, outside the kernel)
# ---------------------------------------------------------------------------
def init_actor_params(key, obs_dim, act_dim):
    """Deterministic init mimicking torch nn.Linear default (uniform +-1/sqrt(fan_in))."""
    ks = jax.random.split(key, 6)

    def linear(kw, kb, fan_in, fan_out):
        bound = 1.0 / jnp.sqrt(jnp.float32(fan_in))
        w = jax.random.uniform(kw, (fan_in, fan_out), jnp.float32, -bound, bound)
        b = jax.random.uniform(kb, (1, fan_out), jnp.float32, -bound, bound)
        return w, b

    w1, b1 = linear(ks[0], ks[1], obs_dim, HIDDEN)
    w2, b2 = linear(ks[2], ks[3], HIDDEN, HIDDEN)
    w3, b3 = linear(ks[4], ks[5], HIDDEN, act_dim)
    return dict(w1=w1, b1=b1, g1=jnp.ones((1, HIDDEN), jnp.float32),
                be1=jnp.zeros((1, HIDDEN), jnp.float32),
                w2=w2, b2=b2, g2=jnp.ones((1, HIDDEN), jnp.float32),
                be2=jnp.zeros((1, HIDDEN), jnp.float32),
                w3=w3, b3=b3)


def pack_actor_params(params, obs_dim, act_dim):
    """Pack all 11 parameter tensors into ONE lane-dense bf16 slab.

    Layout (rows):
      [0, obs_pad)                : w1  (obs_dim real rows)
      [obs_pad, obs_pad+128)      : w2  (64 real rows)
      [obs_pad+128, obs_pad+256)  : w3  (64 real rows, act_dim real cols)
      [obs_pad+256, +8)           : b1, g1, be1, b2, g2, be2, b3, 0
    Padded gamma/beta/bias lanes and padded weight rows/cols are EXACTLY zero,
    so padded columns stay zero through BN / relu / tanh.
    """
    assert 0 < HIDDEN <= PAD and 0 < act_dim <= PAD and obs_dim >= 1, (
        "packing assumes hidden/act widths fit inside the 128-lane pad")
    # bf16 packs 16 rows per sublane-tile -> keep slab section offsets 16-aligned.
    obs_pad = max(16, ((obs_dim + 15) // 16) * 16)

    def pad_w(w, rows, cols_used):
        return jnp.zeros((rows, PAD), jnp.float32).at[:w.shape[0], :cols_used].set(w)

    def row(v, n):
        return jnp.zeros((1, PAD), jnp.float32).at[:, :n].set(v.reshape(1, -1))

    slab_f32 = jnp.concatenate([
        pad_w(params["w1"], obs_pad, HIDDEN),
        pad_w(params["w2"], PAD, HIDDEN),
        pad_w(params["w3"], PAD, act_dim),
        row(params["b1"], HIDDEN),      # row 0 of param block
        row(params["g1"], HIDDEN),      # row 1
        row(params["be1"], HIDDEN),     # row 2
        row(params["b2"], HIDDEN),      # row 3
        row(params["g2"], HIDDEN),      # row 4
        row(params["be2"], HIDDEN),     # row 5
        row(params["b3"], act_dim),     # row 6
        jnp.zeros((1, PAD), jnp.float32),  # row 7 (pad)
    ], axis=0)

    # bf16 storage: halves the weight DMA and feeds the MXU natively on
    # v5e/v6e/v7x; matmuls still accumulate in f32 inside the kernel.
    return dict(slab=slab_f32.astype(jnp.bfloat16),
                obs_pad=int(obs_pad), obs_dim=int(obs_dim), act_dim=int(act_dim))


# ---------------------------------------------------------------------------
# Forward wrapper
# ---------------------------------------------------------------------------
def actor_forward(x, packed, *, trim_output=True):
    """Dispatch on batch size (static) like the PyTorch forward does.

    Set trim_output=False to get the lane-dense (B, 128) padded output and
    avoid the extra XLA slice op when the consumer can handle padding.
    """
    B = int(x.shape[0])
    obs_dim, obs_pad = packed["obs_dim"], packed["obs_pad"]
    act_dim = packed["act_dim"]
    assert x.shape[1] == obs_dim, (x.shape, obs_dim)

    kernel = functools.partial(
        _actor_kernel_nobn if B == 1 else _actor_kernel_bn,
        obs_dim=obs_dim, obs_pad=obs_pad)

    vmem_spec = pl.BlockSpec(memory_space=pltpu.MemorySpace.VMEM)
    out_padded = pl.pallas_call(
        kernel,
        out_shape=jax.ShapeDtypeStruct((B, PAD), jnp.float32),
        in_specs=[vmem_spec, vmem_spec],          # x (unpadded), packed slab
        out_specs=vmem_spec,
        scratch_shapes=[pltpu.VMEM((B, obs_pad), jnp.float32)],   # in-kernel x pad
        compiler_params=pltpu.CompilerParams(
            vmem_limit_bytes=32 * 1024 * 1024),   # safe on v7x's smaller VMEM
    )(x.astype(jnp.float32), packed["slab"])

    return out_padded[:, :act_dim] if trim_output else out_padded


# ---------------------------------------------------------------------------
# Pure-JAX reference (faithful to the PyTorch module)
# ---------------------------------------------------------------------------
def _reference_forward(x, p, *, quantize=False):
    """quantize=True mirrors the kernel's bf16 weight storage / matmul inputs."""
    if quantize:
        cast = lambda a: a.astype(jnp.bfloat16).astype(jnp.float32)
    else:
        cast = lambda a: a
    w1, w2, w3 = cast(p["w1"]), cast(p["w2"]), cast(p["w3"])
    b1, b2, b3 = cast(p["b1"]), cast(p["b2"]), cast(p["b3"])
    g1, be1 = cast(p["g1"]), cast(p["be1"])
    g2, be2 = cast(p["g2"]), cast(p["be2"])
    mm = lambda a, w: jnp.dot(cast(a), w, preferred_element_type=jnp.float32)

    if x.shape[0] == 1:
        h = jnp.maximum(mm(x, w1) + b1, 0.0)
        h = jnp.maximum(mm(h, w2) + b2, 0.0)
        return mm(h, w3) + b3

    def bn(h, g, be):
        mu = jnp.mean(h, axis=0, keepdims=True)
        var = jnp.mean((h - mu) ** 2, axis=0, keepdims=True)   # biased variance
        return (h - mu) / jnp.sqrt(var + BN_EPS) * g + be

    h = jnp.maximum(bn(mm(x, w1) + b1, g1, be1), 0.0)
    h = jnp.maximum(bn(mm(h, w2) + b2, g2, be2), 0.0)
    return jnp.tanh(mm(h, w3) + b3)


if __name__ == "__main__":
    obs_dim, act_dim, batch = 10, 4, 16   # obs_dim=10 exercises the in-kernel pad path

    key = jax.random.PRNGKey(0)
    k_param, k_x = jax.random.split(key)
    params = init_actor_params(k_param, obs_dim, act_dim)
    packed = pack_actor_params(params, obs_dim, act_dim)
    x = jax.random.normal(k_x, (batch, obs_dim), jnp.float32)

    # --- Batch > 1 path (BN + tanh) -------------------------------------
    out = jax.block_until_ready(actor_forward(x, packed))
    assert out.shape == (batch, act_dim)
    # Tight check vs. a reference that uses the same bf16-rounded operands
    # (validates the kernel math; remaining diff = one-pass variance / rsqrt
    # / accumulation-order rounding).
    ref_q = _reference_forward(x, params, quantize=True)
    assert jnp.allclose(out, ref_q, atol=5e-4, rtol=5e-4), (out, ref_q)
    # Loose check vs. the exact f32 PyTorch-semantics reference (bf16 weight
    # storage is the only approximation).
    ref_f32 = _reference_forward(x, params, quantize=False)
    assert jnp.allclose(out, ref_f32, atol=3e-2, rtol=3e-2), (out, ref_f32)

    # --- Batch == 1 path (no BN, no tanh) --------------------------------
    out1 = jax.block_until_ready(actor_forward(x[:1], packed))
    assert out1.shape == (1, act_dim)
    ref1_q = _reference_forward(x[:1], params, quantize=True)
    assert jnp.allclose(out1, ref1_q, atol=5e-4, rtol=5e-4), (out1, ref1_q)
    ref1_f32 = _reference_forward(x[:1], params, quantize=False)
    assert jnp.allclose(out1, ref1_f32, atol=3e-2, rtol=3e-2), (out1, ref1_f32)

    # Padded-output (no trim) path also works.
    out_pad = jax.block_until_ready(actor_forward(x, packed, trim_output=False))
    assert out_pad.shape == (batch, PAD)
    assert jnp.allclose(out_pad[:, :act_dim], out)

    print("KERNEL_OK")
</pallas_src>

<mosaic_0001>
module attributes {stable_mosaic.version = 11 : i64} {
  func.func @_actor_kernel_bn(%arg0: memref<16x10xf32, #tpu.memory_space<vmem>>, %arg1: memref<280x128xbf16, #tpu.memory_space<vmem>>, %arg2: memref<16x128xf32, #tpu.memory_space<vmem>>, %arg3: memref<16x16xf32, #tpu.memory_space<vmem>>) attributes {dimension_semantics = [], scalar_prefetch = 0 : i64, scratch_operands = 1 : i64, tpu.core_type = #tpu.core_type<tc>} {
    %cst = arith.constant 0.000000e+00 : f32
    %0 = vector.broadcast %cst : f32 to vector<16x16xf32>
    %c0 = arith.constant 0 : index
    %c0_0 = arith.constant 0 : index
    %1 = vector.load %arg3[%c0, %c0_0] : memref<16x16xf32, #tpu.memory_space<vmem>>, vector<16x16xf32>
    tpu.vector_store %arg3[%c0, %c0_0], %0 {strides = array<i32>} : memref<16x16xf32, #tpu.memory_space<vmem>>, vector<16x16xf32>,
    %c0_1 = arith.constant 0 : index
    %c0_2 = arith.constant 0 : index
    %2 = vector.load %arg0[%c0_1, %c0_2] : memref<16x10xf32, #tpu.memory_space<vmem>>, vector<16x10xf32>
    %c0_3 = arith.constant 0 : index
    %c0_4 = arith.constant 0 : index
    %3 = vector.load %arg3[%c0_3, %c0_4] : memref<16x16xf32, #tpu.memory_space<vmem>>, vector<16x10xf32>
    tpu.vector_store %arg3[%c0_3, %c0_4], %2 {strides = array<i32>} : memref<16x16xf32, #tpu.memory_space<vmem>>, vector<16x10xf32>,
    %c0_5 = arith.constant 0 : index
    %c0_6 = arith.constant 0 : index
    %4 = vector.load %arg3[%c0_5, %c0_6] : memref<16x16xf32, #tpu.memory_space<vmem>>, vector<16x16xf32>
    %c0_7 = arith.constant 0 : index
    %c0_8 = arith.constant 0 : index
    %5 = vector.load %arg1[%c0_7, %c0_8] : memref<280x128xbf16, #tpu.memory_space<vmem>>, vector<16x128xbf16>
    %c16 = arith.constant 16 : index
    %c0_9 = arith.constant 0 : index
    %6 = vector.load %arg1[%c16, %c0_9] : memref<280x128xbf16, #tpu.memory_space<vmem>>, vector<128x128xbf16>
    %c144 = arith.constant 144 : index
    %c0_10 = arith.constant 0 : index
    %7 = vector.load %arg1[%c144, %c0_10] : memref<280x128xbf16, #tpu.memory_space<vmem>>, vector<128x128xbf16>
    %c272 = arith.constant 272 : index
    %c0_11 = arith.constant 0 : index
    %8 = vector.load %arg1[%c272, %c0_11] : memref<280x128xbf16, #tpu.memory_space<vmem>>, vector<8x128xbf16>
    %9 = arith.extf %8 : vector<8x128xbf16> to vector<8x128xf32>
    %10 = vector.extract_strided_slice %9 {offsets = [1, 0], sizes = [1, 128], strides = [1, 1]} : vector<8x128xf32> to vector<1x128xf32>
    %11 = vector.extract_strided_slice %9 {offsets = [2, 0], sizes = [1, 128], strides = [1, 1]} : vector<8x128xf32> to vector<1x128xf32>
    %12 = vector.extract_strided_slice %9 {offsets = [4, 0], sizes = [1, 128], strides = [1, 1]} : vector<8x128xf32> to vector<1x128xf32>
    %13 = vector.extract_strided_slice %9 {offsets = [5, 0], sizes = [1, 128], strides = [1, 1]} : vector<8x128xf32> to vector<1x128xf32>
    %14 = vector.extract_strided_slice %9 {offsets = [6, 0], sizes = [1, 128], strides = [1, 1]} : vector<8x128xf32> to vector<1x128xf32>
    %15 = arith.truncf %4 : vector<16x16xf32> to vector<16x16xbf16>
    %cst_12 = arith.constant dense<0.000000e+00> : vector<16x128xf32>
    %16 = tpu.matmul %15, %5, %cst_12 {dimension_numbers = #tpu.dot_dimension_numbers<[1], [0], [0], [1], [0, 0, 1, 1], [], []>} : vector<16x16xbf16>, vector<16x128xbf16>, vector<16x128xf32> -> vector<16x128xf32>
    %cst_13 = arith.constant dense<0.000000e+00> : vector<128xf32>
    %17 = vector.multi_reduction <add>, %16, %cst_13 [0] : vector<16x128xf32> to vector<128xf32>
    %18 = vector.shape_cast %17 : vector<128xf32> to vector<1x128xf32>
    %cst_14 = arith.constant 1.600000e+01 : f32
    %19 = vector.broadcast %cst_14 : f32 to vector<1x128xf32>
    %20 = arith.divf %18, %19 : vector<1x128xf32>
    %21 = arith.mulf %16, %16 : vector<16x128xf32>
    %cst_15 = arith.constant dense<0.000000e+00> : vector<128xf32>
    %22 = vector.multi_reduction <add>, %21, %cst_15 [0] : vector<16x128xf32> to vector<128xf32>
    %23 = vector.shape_cast %22 : vector<128xf32> to vector<1x128xf32>
    %cst_16 = arith.constant 1.600000e+01 : f32
    %24 = vector.broadcast %cst_16 : f32 to vector<1x128xf32>
    %25 = arith.divf %23, %24 : vector<1x128xf32>
    %26 = arith.mulf %20, %20 : vector<1x128xf32>
    %27 = arith.subf %25, %26 : vector<1x128xf32>
    %cst_17 = arith.constant 0.000000e+00 : f32
    %28 = vector.broadcast %cst_17 : f32 to vector<1x128xf32>
    %29 = arith.maximumf %27, %28 : vector<1x128xf32>
    %cst_18 = arith.constant 9.99999974E-6 : f32
    %30 = vector.broadcast %cst_18 : f32 to vector<1x128xf32>
    %31 = arith.addf %29, %30 : vector<1x128xf32>
    %32 = math.rsqrt %31 : vector<1x128xf32>
    %33 = arith.mulf %10, %32 : vector<1x128xf32>
    %34 = arith.mulf %20, %33 : vector<1x128xf32>
    %35 = arith.subf %11, %34 : vector<1x128xf32>
    %36 = vector.broadcast %33 : vector<1x128xf32> to vector<16x128xf32>
    %37 = arith.mulf %16, %36 : vector<16x128xf32>
    %38 = vector.broadcast %35 : vector<1x128xf32> to vector<16x128xf32>
    %39 = arith.addf %37, %38 : vector<16x128xf32>
    %cst_19 = arith.constant 0.000000e+00 : f32
    %40 = vector.broadcast %cst_19 : f32 to vector<16x128xf32>
    %41 = arith.maximumf %39, %40 : vector<16x128xf32>
    %42 = arith.truncf %41 : vector<16x128xf32> to vector<16x128xbf16>
    %cst_20 = arith.constant dense<0.000000e+00> : vector<16x128xf32>
    %43 = tpu.matmul %42, %6, %cst_20 {dimension_numbers = #tpu.dot_dimension_numbers<[1], [0], [0], [1], [0, 0, 1, 1], [], []>} : vector<16x128xbf16>, vector<128x128xbf16>, vector<16x128xf32> -> vector<16x128xf32>
    %cst_21 = arith.constant dense<0.000000e+00> : vector<128xf32>
    %44 = vector.multi_reduction <add>, %43, %cst_21 [0] : vector<16x128xf32> to vector<128xf32>
    %45 = vector.shape_cast %44 : vector<128xf32> to vector<1x128xf32>
    %cst_22 = arith.constant 1.600000e+01 : f32
    %46 = vector.broadcast %cst_22 : f32 to vector<1x128xf32>
    %47 = arith.divf %45, %46 : vector<1x128xf32>
    %48 = arith.mulf %43, %43 : vector<16x128xf32>
    %cst_23 = arith.constant dense<0.000000e+00> : vector<128xf32>
    %49 = vector.multi_reduction <add>, %48, %cst_23 [0] : vector<16x128xf32> to vector<128xf32>
    %50 = vector.shape_cast %49 : vector<128xf32> to vector<1x128xf32>
    %cst_24 = arith.constant 1.600000e+01 : f32
    %51 = vector.broadcast %cst_24 : f32 to vector<1x128xf32>
    %52 = arith.divf %50, %51 : vector<1x128xf32>
    %53 = arith.mulf %47, %47 : vector<1x128xf32>
    %54 = arith.subf %52, %53 : vector<1x128xf32>
    %cst_25 = arith.constant 0.000000e+00 : f32
    %55 = vector.broadcast %cst_25 : f32 to vector<1x128xf32>
    %56 = arith.maximumf %54, %55 : vector<1x128xf32>
    %cst_26 = arith.constant 9.99999974E-6 : f32
    %57 = vector.broadcast %cst_26 : f32 to vector<1x128xf32>
    %58 = arith.addf %56, %57 : vector<1x128xf32>
    %59 = math.rsqrt %58 : vector<1x128xf32>
    %60 = arith.mulf %12, %59 : vector<1x128xf32>
    %61 = arith.mulf %47, %60 : vector<1x128xf32>
    %62 = arith.subf %13, %61 : vector<1x128xf32>
    %63 = vector.broadcast %60 : vector<1x128xf32> to vector<16x128xf32>
    %64 = arith.mulf %43, %63 : vector<16x128xf32>
    %65 = vector.broadcast %62 : vector<1x128xf32> to vector<16x128xf32>
    %66 = arith.addf %64, %65 : vector<16x128xf32>
    %cst_27 = arith.constant 0.000000e+00 : f32
    %67 = vector.broadcast %cst_27 : f32 to vector<16x128xf32>
    %68 = arith.maximumf %66, %67 : vector<16x128xf32>
    %69 = arith.truncf %68 : vector<16x128xf32> to vector<16x128xbf16>
    %cst_28 = arith.constant dense<0.000000e+00> : vector<16x128xf32>
    %70 = tpu.matmul %69, %7, %cst_28 {dimension_numbers = #tpu.dot_dimension_numbers<[1], [0], [0], [1], [0, 0, 1, 1], [], []>} : vector<16x128xbf16>, vector<128x128xbf16>, vector<16x128xf32> -> vector<16x128xf32>
    %71 = vector.broadcast %14 : vector<1x128xf32> to vector<16x128xf32>
    %72 = arith.addf %70, %71 : vector<16x128xf32>
    %73 = math.tanh %72 : vector<16x128xf32>
    %c0_29 = arith.constant 0 : index
    %c0_30 = arith.constant 0 : index
    %74 = vector.load %arg2[%c0_29, %c0_30] : memref<16x128xf32, #tpu.memory_space<vmem>>, vector<16x128xf32>
    tpu.vector_store %arg2[%c0_29, %c0_30], %73 {strides = array<i32>} : memref<16x128xf32, #tpu.memory_space<vmem>>, vector<16x128xf32>,
    return
  }
}

</mosaic_0001>

<llo_original>
// kernel: tpu_custom_call.1
$region0: #{tpu_custom_call.1}
  #allocation0 [shape = 'u32[]', space=smem, size = 0x4, offset = 0x4, fixed_abs, tag = 'smem constant byte address 0x4 - core index']
  #allocation1 [shape = 'u32[144,128]{1,0:T(1,128)}', space=vmem, size = 0x12000, scoped, tag = 'internal scratch']
  #allocation2 [shape = 'f32[16,16]{1,0:T(8,128)}', space=vmem, size = 0x2000, scoped, tag = 'scratch operand']
  %s0 = inlined_call_operand.hbm [shape: f32[16,10], index: 0, kind: input, shape index: {}]
  %s1 = inlined_call_operand.hbm [shape: bf16[280,128], index: 1, kind: input, shape index: {}]
  %s2 = inlined_call_operand.hbm [shape: f32[16,128], index: 2, kind: output, shape index: {}]
  %s3 = sld [smem:[#allocation0]]
  $region26: #{tpu_custom_call.1} parent=0
    _
  %s5 = ssub.s32 1, %s3
  %s6 = scalar_select 0, %s5, %s3
  $region1: #{tpu_custom_call.1} parent=0
    #allocation3 [shape = 'u8[8192]{0}', space=vmem, size = 0x2000, scoped, tag = 'input window, operand 0, single buffered']
    #allocation4 [shape = 's32[1]{0}', space=sflag, size = 0x4, scoped, tag = 'scoped memory for tpu_custom_call.1']
    #allocation5 [shape = 's32[1]{0}', space=sflag, size = 0x4, scoped, tag = 'scoped memory for tpu_custom_call.1']
    #allocation6 [shape = 'u8[71680]{0}', space=vmem, size = 0x11800, scoped, tag = 'input window, operand 1, single buffered']
    #allocation7 [shape = 's32[1]{0}', space=sflag, size = 0x4, scoped, tag = 'scoped memory for tpu_custom_call.1']
    #allocation8 [shape = 'u8[8192]{0}', space=vmem, size = 0x2000, scoped, tag = 'output window, operand 0, single buffered']
    %7 = vsyncpa [#allocation4], 0
    %8 = vsyncpa [#allocation7], 0
    %9 = vsyncpa [#allocation5], 0
    // Predicated region
    $region2: #{tpu_custom_call.1} parent=1 // pred_check
      _
    $region3: #{tpu_custom_call.1} parent=1 // pred_check_branch
      %11 = sbr.rel (0) target = $region5
    $region4: #{tpu_custom_call.1} parent=1 // pred_region
      %s13 = ssub.s32 256, 256
      %14 = vsyncadd [#allocation4], %s13
      %s15 = sshll.u32 [#allocation3], 4
      %s16 = int_to_ptr.vmem [resolvable:$true] %s15
      %21 = dma.hbm_to_vmem [thread:$0]  %s0, 256, %s16, [#allocation4], 128, 128, 8
    $region5: #{tpu_custom_call.1} parent=1 // pred_fallthru
      _
    // Predicated region
    $region6: #{tpu_custom_call.1} parent=1 // pred_check
      _
    $region7: #{tpu_custom_call.1} parent=1 // pred_check_branch
      %23 = sbr.rel (0) target = $region9
    $region8: #{tpu_custom_call.1} parent=1 // pred_region
      %s25 = ssub.s32 2240, 2240
      %26 = vsyncadd [#allocation7], %s25
      %s27 = sshll.u32 [#allocation6], 4
      %s28 = int_to_ptr.vmem [resolvable:$true] %s27
      %33 = dma.hbm_to_vmem [thread:$0]  %s1, 2240, %s28, [#allocation7], 64, 64, 4
    $region9: #{tpu_custom_call.1} parent=1 // pred_fallthru
      _
    // Predicated region
    $region10: #{tpu_custom_call.1} parent=1 // pred_check
      _
    $region11: #{tpu_custom_call.1} parent=1 // pred_check_branch
      %35 = sbr.rel (0) target = $region13
    $region12: #{tpu_custom_call.1} parent=1 // pred_region
      %36 = dma.done [#allocation4], 256
    $region13: #{tpu_custom_call.1} parent=1 // pred_fallthru
      _
    // Predicated region
    $region14: #{tpu_custom_call.1} parent=1 // pred_check
      _
    $region15: #{tpu_custom_call.1} parent=1 // pred_check_branch
      %38 = sbr.rel (0) target = $region17
    $region16: #{tpu_custom_call.1} parent=1 // pred_region
      %39 = dma.done [#allocation7], 2240
    $region17: #{tpu_custom_call.1} parent=1 // pred_fallthru
      _
    %vm41 = vcmask 130048
    %42 = vst.msk [vmem:[#allocation2] sm:$0xff] %vm41, 0.0
    %43 = vst.msk [vmem:[#allocation2 + $0x8] sm:$0xff] %vm41, 0.0
    %v44 = vld [vmem:[#allocation3] sm:$0xff]
    %v45 = vld [vmem:[#allocation3 + $0x8] sm:$0xff]
    %vm46 = vcmask 80896
    %47 = vst.msk [vmem:[#allocation2] sm:$0xff] %vm46, %v44
    %48 = vst.msk [vmem:[#allocation2 + $0x8] sm:$0xff] %vm46, %v45
    %v49 = vld [vmem:[#allocation2] sm:$0xff]
    %v50 = vld [vmem:[#allocation2 + $0x8] sm:$0xff]
    %v51 = vld [vmem:[#allocation6] sm:$0xf]
    %v52 = vld [vmem:[#allocation6 + $0x4] sm:$0xf]
    %v53 = vld [vmem:[#allocation6 + $0x8] sm:$0xf]
    %v54 = vld [vmem:[#allocation6 + $0xc] sm:$0xf]
    %v55 = vld [vmem:[#allocation6 + $0x10] sm:$0xf]
    %v56 = vld [vmem:[#allocation6 + $0x14] sm:$0xf]
    %v57 = vld [vmem:[#allocation6 + $0x18] sm:$0xf]
    %v58 = vld [vmem:[#allocation6 + $0x1c] sm:$0xf]
    %v59 = vld [vmem:[#allocation6 + $0x20] sm:$0xf]
    %v60 = vld [vmem:[#allocation6 + $0x24] sm:$0xf]
    %v61 = vld [vmem:[#allocation6 + $0x28] sm:$0xf]
    %v62 = vld [vmem:[#allocation6 + $0x2c] sm:$0xf]
    %v63 = vld [vmem:[#allocation6 + $0x30] sm:$0xf]
    %v64 = vld [vmem:[#allocation6 + $0x34] sm:$0xf]
    %v65 = vld [vmem:[#allocation6 + $0x38] sm:$0xf]
    %v66 = vld [vmem:[#allocation6 + $0x3c] sm:$0xf]
    %v67 = vld [vmem:[#allocation6 + $0x40] sm:$0xf]
    %v68 = vld [vmem:[#allocation6 + $0x44] sm:$0xf]
    %v69 = vld [vmem:[#allocation6 + $0x48] sm:$0xf]
    %v70 = vld [vmem:[#allocation6 + $0x4c] sm:$0xf]
    %v71 = vld [vmem:[#allocation6 + $0x50] sm:$0xf]
    %v72 = vld [vmem:[#allocation6 + $0x54] sm:$0xf]
    %v73 = vld [vmem:[#allocation6 + $0x58] sm:$0xf]
    %v74 = vld [vmem:[#allocation6 + $0x5c] sm:$0xf]
    %v75 = vld [vmem:[#allocation6 + $0x60] sm:$0xf]
    %v76 = vld [vmem:[#allocation6 + $0x64] sm:$0xf]
    %v77 = vld [vmem:[#allocation6 + $0x68] sm:$0xf]
    %v78 = vld [vmem:[#allocation6 + $0x6c] sm:$0xf]
    %v79 = vld [vmem:[#allocation6 + $0x70] sm:$0xf]
    %v80 = vld [vmem:[#allocation6 + $0x74] sm:$0xf]
    %v81 = vld [vmem:[#allocation6 + $0x78] sm:$0xf]
    %v82 = vld [vmem:[#allocation6 + $0x7c] sm:$0xf]
    %v83 = vld [vmem:[#allocation6 + $0x80] sm:$0xf]
    %v84 = vld [vmem:[#allocation6 + $0x84] sm:$0xf]
    %v85 = vld [vmem:[#allocation6 + $0x88] sm:$0xf]
    %v86 = vunpack.c.l.bf16 %v85
    %v87 = vpack.c.bf16 %v50, %v49
    %v90 = vunpack.c.l.b16 %v51
    %v91 = vunpack.c.l.b16 %v52
    %v92 = vpack.c.b16 %v91, %v90
    %v95 = vsel %vm41, %v87, 0
    %97 = vmatprep.subr.bf16.mxu0 0
    %98 = vmatpush1.bf16.msra.mxu0 %v92
    %99 = vmatprep.subr.bf16.mxu0 0
    %100 = vmatpush1.bf16.msra.mxu0 0
    %101 = vmatprep.subr.bf16.mxu0 0
    %102 = vmatpush1.bf16.msra.mxu0 0
    %103 = vmatprep.subr.bf16.mxu0 0
    %104 = vmatpush1.bf16.msra.mxu0 0
    %105 = vmatprep.subr.bf16.mxu0 0
    %106 = vmatpush1.bf16.msra.mxu0 0
    %107 = vmatprep.subr.bf16.mxu0 0
    %108 = vmatpush1.bf16.msra.mxu0 0
    %109 = vmatprep.subr.bf16.mxu0 0
    %110 = vmatpush1.bf16.msra.mxu0 0
    %111 = vmatprep.subr.bf16.mxu0 0
    %112 = vmatpush1.bf16.msra.mxu0 0
    %113 = vmatprep.subr.bf16.mxu0 0
    %114 = vmatpush1.bf16.msra.mxu0 0
    %115 = vmatprep.subr.bf16.mxu0 0
    %116 = vmatpush1.bf16.msra.mxu0 0
    %117 = vmatprep.subr.bf16.mxu0 0
    %118 = vmatpush1.bf16.msra.mxu0 0
    %119 = vmatprep.subr.bf16.mxu0 0
    %120 = vmatpush1.bf16.msra.mxu0 0
    %121 = vmatprep.subr.bf16.mxu0 0
    %122 = vmatpush1.bf16.msra.mxu0 0
    %123 = vmatprep.subr.bf16.mxu0 0
    %124 = vmatpush1.bf16.msra.mxu0 0
    %125 = vmatprep.subr.bf16.mxu0 0
    %126 = vmatpush1.bf16.msra.mxu0 0
    %127 = vmatprep.subr.bf16.mxu0 0
    %128 = vmatpush1.bf16.msra.mxu0 0
    %129 = vmatprep.mubr.bf16.mxu0 0
    %130 = vmatmul.mubr.bf16.gmra.mrb[0].mxu0 %v95
    %v131 = vpop.f32.mrb[0].mxu0
    %v132 = vadd.f32 0.0, %v131
    %v133 = vpop.f32.mrb[0].mxu0
    %v134 = vpop.f32.mrb[0].mxu0
    %v135 = vadd.f32 0.0, %v134
    %v136 = vpop.f32.mrb[0].mxu0
    %137 = vdwg.mxu0
    %v138 = vadd.f32 %v132, %v135
    %v139 = vrot.slane %v138, 4
    %v140 = vadd.f32 %v138, %v139
    %v141 = vrot.slane %v140, 2
    %v142 = vadd.f32 %v140, %v141
    %v143 = vrot.slane %v142, 1
    %v144 = vadd.f32 %v142, %v143
    %v145 = vrcp.pop 16.0
    %v146 = vmul.f32 %v144, %v145
    %v147 = vmul.f32 %v132, %v132
    %v148 = vmul.f32 %v135, %v135
    %v149 = vadd.f32 %v147, %v148
    %v150 = vrot.slane %v149, 4
    %v151 = vadd.f32 %v149, %v150
    %v152 = vrot.slane %v151, 2
    %v153 = vadd.f32 %v151, %v152
    %v154 = vrot.slane %v153, 1
    %v155 = vadd.f32 %v153, %v154
    %v156 = vmul.f32 %v155, %v145
    %v157 = vmul.f32 %v146, %v146
    %v158 = vsub.f32 %v156, %v157
    %v159 = vmax.f32 %v158, 0.0
    %v160 = vadd.f32 %v159, 1e-05
    %v161 = vrsqrt.pop %v160
    %v162 = vmul.f32 %v86, %v161
    %v163 = vmul.f32 %v146, %v162
    %v165 = vrot.slane %v163, 7
    %v167 = vsub.f32 %v86, %v165
    %v168 = vlaneseq
    %v169 = vshrl.u32 %v168, 7
    %v170 = vsub.s32 1, %v169
    %v171 = vrot.slane %v162, %v170
    %v172 = vmul.f32 %v132, %v171
    %v173 = vmul.f32 %v135, %v171
    %v174 = vlaneseq
    %v175 = vshrl.u32 %v174, 7
    %v176 = vsub.s32 2, %v175
    %v177 = vrot.slane %v167, %v176
    %v178 = vadd.f32 %v172, %v177
    %v179 = vadd.f32 %v173, %v177
    %v180 = vmax.f32 %v178, 0.0
    %v181 = vmax.f32 %v179, 0.0
    %v182 = vpack.c.bf16 %v181, %v180
    %v199 = vunpack.c.l.b16 %v53
    %v200 = vunpack.c.l.b16 %v54
    %v201 = vunpack.c.l.b16 %v55
    %v202 = vunpack.c.l.b16 %v56
    %v203 = vunpack.c.l.b16 %v57
    %v204 = vunpack.c.l.b16 %v58
    %v205 = vunpack.c.l.b16 %v59
    %v206 = vunpack.c.l.b16 %v60
    %v207 = vunpack.c.l.b16 %v61
    %v208 = vunpack.c.l.b16 %v62
    %v209 = vunpack.c.l.b16 %v63
    %v210 = vunpack.c.l.b16 %v64
    %v211 = vunpack.c.l.b16 %v65
    %v212 = vunpack.c.l.b16 %v66
    %v213 = vunpack.c.l.b16 %v67
    %v214 = vunpack.c.l.b16 %v68
    %v215 = vpack.c.b16 %v200, %v199
    %v216 = vpack.c.b16 %v202, %v201
    %v217 = vpack.c.b16 %v204, %v203
    %v218 = vpack.c.b16 %v206, %v205
    %v219 = vpack.c.b16 %v208, %v207
    %v220 = vpack.c.b16 %v210, %v209
    %v221 = vpack.c.b16 %v212, %v211
    %v222 = vpack.c.b16 %v214, %v213
    %231 = vmatprep.subr.bf16.mxu0 0
    %232 = vmatpush1.bf16.msra.mxu0 %v215
    %233 = vmatprep.subr.bf16.mxu0 0
    %234 = vmatpush1.bf16.msra.mxu0 %v216
    %235 = vmatprep.subr.bf16.mxu0 0
    %236 = vmatpush1.bf16.msra.mxu0 %v217
    %237 = vmatprep.subr.bf16.mxu0 0
    %238 = vmatpush1.bf16.msra.mxu0 %v218
    %239 = vmatprep.subr.bf16.mxu0 0
    %240 = vmatpush1.bf16.msra.mxu0 %v219
    %241 = vmatprep.subr.bf16.mxu0 0
    %242 = vmatpush1.bf16.msra.mxu0 %v220
    %243 = vmatprep.subr.bf16.mxu0 0
    %244 = vmatpush1.bf16.msra.mxu0 %v221
    %245 = vmatprep.subr.bf16.mxu0 0
    %246 = vmatpush1.bf16.msra.mxu0 %v222
    %247 = vmatprep.subr.bf16.mxu0 0
    %248 = vmatpush1.bf16.msra.mxu0 0
    %249 = vmatprep.subr.bf16.mxu0 0
    %250 = vmatpush1.bf16.msra.mxu0 0
    %251 = vmatprep.subr.bf16.mxu0 0
    %252 = vmatpush1.bf16.msra.mxu0 0
    %253 = vmatprep.subr.bf16.mxu0 0
    %254 = vmatpush1.bf16.msra.mxu0 0
    %255 = vmatprep.subr.bf16.mxu0 0
    %256 = vmatpush1.bf16.msra.mxu0 0
    %257 = vmatprep.subr.bf16.mxu0 0
    %258 = vmatpush1.bf16.msra.mxu0 0
    %259 = vmatprep.subr.bf16.mxu0 0
    %260 = vmatpush1.bf16.msra.mxu0 0
    %261 = vmatprep.subr.bf16.mxu0 0
    %262 = vmatpush1.bf16.msra.mxu0 0
    %263 = vmatprep.mubr.bf16.mxu0 0
    %264 = vmatmul.mubr.bf16.gmra.mrb[0].mxu0 %v182
    %v265 = vpop.f32.mrb[0].mxu0
    %v266 = vadd.f32 0.0, %v265
    %v267 = vpop.f32.mrb[0].mxu0
    %v268 = vpop.f32.mrb[0].mxu0
    %v269 = vadd.f32 0.0, %v268
    %v270 = vpop.f32.mrb[0].mxu0
    %271 = vdwg.mxu0
    %v272 = vadd.f32 %v266, %v269
    %v273 = vrot.slane %v272, 4
    %v274 = vadd.f32 %v272, %v273
    %v275 = vrot.slane %v274, 2
    %v276 = vadd.f32 %v274, %v275
    %v277 = vrot.slane %v276, 1
    %v278 = vadd.f32 %v276, %v277
    %v279 = vmul.f32 %v278, %v145
    %v280 = vmul.f32 %v266, %v266
    %v281 = vmul.f32 %v269, %v269
    %v282 = vadd.f32 %v280, %v281
    %v283 = vrot.slane %v282, 4
    %v284 = vadd.f32 %v282, %v283
    %v285 = vrot.slane %v284, 2
    %v286 = vadd.f32 %v284, %v285
    %v287 = vrot.slane %v286, 1
    %v288 = vadd.f32 %v286, %v287
    %v289 = vmul.f32 %v288, %v145
    %v290 = vmul.f32 %v279, %v279
    %v291 = vsub.f32 %v289, %v290
    %v292 = vmax.f32 %v291, 0.0
    %v293 = vadd.f32 %v292, 1e-05
    %v294 = vrsqrt.pop %v293
    %v295 = vmul.f32 %v86, %v294
    %v296 = vmul.f32 %v279, %v295
    %v298 = vrot.slane %v296, 7
    %v300 = vsub.f32 %v86, %v298
    %v301 = vlaneseq
    %v302 = vshrl.u32 %v301, 7
    %v303 = vsub.s32 4, %v302
    %v304 = vrot.slane %v295, %v303
    %v305 = vmul.f32 %v266, %v304
    %v306 = vmul.f32 %v269, %v304
    %v307 = vlaneseq
    %v308 = vshrl.u32 %v307, 7
    %v309 = vsub.s32 5, %v308
    %v310 = vrot.slane %v300, %v309
    %v311 = vadd.f32 %v305, %v310
    %v312 = vadd.f32 %v306, %v310
    %v313 = vmax.f32 %v311, 0.0
    %v314 = vmax.f32 %v312, 0.0
    %v315 = vpack.c.bf16 %v314, %v313
    %v316 = vlaneseq
    %v317 = vshrl.u32 %v316, 7
    %v318 = vsub.s32 6, %v317
    %v319 = vrot.slane %v86, %v318
    %v336 = vunpack.c.l.b16 %v69
    %v337 = vunpack.c.l.b16 %v70
    %v338 = vunpack.c.l.b16 %v71
    %v339 = vunpack.c.l.b16 %v72
    %v340 = vunpack.c.l.b16 %v73
    %v341 = vunpack.c.l.b16 %v74
    %v342 = vunpack.c.l.b16 %v75
    %v343 = vunpack.c.l.b16 %v76
    %v344 = vunpack.c.l.b16 %v77
    %v345 = vunpack.c.l.b16 %v78
    %v346 = vunpack.c.l.b16 %v79
    %v347 = vunpack.c.l.b16 %v80
    %v348 = vunpack.c.l.b16 %v81
    %v349 = vunpack.c.l.b16 %v82
    %v350 = vunpack.c.l.b16 %v83
    %v351 = vunpack.c.l.b16 %v84
    %v352 = vpack.c.b16 %v337, %v336
    %v353 = vpack.c.b16 %v339, %v338
    %v354 = vpack.c.b16 %v341, %v340
    %v355 = vpack.c.b16 %v343, %v342
    %v356 = vpack.c.b16 %v345, %v344
    %v357 = vpack.c.b16 %v347, %v346
    %v358 = vpack.c.b16 %v349, %v348
    %v359 = vpack.c.b16 %v351, %v350
    %368 = vmatprep.subr.bf16.mxu0 0
    %369 = vmatpush1.bf16.msra.mxu0 %v352
    %370 = vmatprep.subr.bf16.mxu0 0
    %371 = vmatpush1.bf16.msra.mxu0 %v353
    %372 = vmatprep.subr.bf16.mxu0 0
    %373 = vmatpush1.bf16.msra.mxu0 %v354
    %374 = vmatprep.subr.bf16.mxu0 0
    %375 = vmatpush1.bf16.msra.mxu0 %v355
    %376 = vmatprep.subr.bf16.mxu0 0
    %377 = vmatpush1.bf16.msra.mxu0 %v356
    %378 = vmatprep.subr.bf16.mxu0 0
    %379 = vmatpush1.bf16.msra.mxu0 %v357
    %380 = vmatprep.subr.bf16.mxu0 0
    %381 = vmatpush1.bf16.msra.mxu0 %v358
    %382 = vmatprep.subr.bf16.mxu0 0
    %383 = vmatpush1.bf16.msra.mxu0 %v359
    %384 = vmatprep.subr.bf16.mxu0 0
    %385 = vmatpush1.bf16.msra.mxu0 0
    %386 = vmatprep.subr.bf16.mxu0 0
    %387 = vmatpush1.bf16.msra.mxu0 0
    %388 = vmatprep.subr.bf16.mxu0 0
    %389 = vmatpush1.bf16.msra.mxu0 0
    %390 = vmatprep.subr.bf16.mxu0 0
    %391 = vmatpush1.bf16.msra.mxu0 0
    %392 = vmatprep.subr.bf16.mxu0 0
    %393 = vmatpush1.bf16.msra.mxu0 0
    %394 = vmatprep.subr.bf16.mxu0 0
    %395 = vmatpush1.bf16.msra.mxu0 0
    %396 = vmatprep.subr.bf16.mxu0 0
    %397 = vmatpush1.bf16.msra.mxu0 0
    %398 = vmatprep.subr.bf16.mxu0 0
    %399 = vmatpush1.bf16.msra.mxu0 0
    %400 = vmatprep.mubr.bf16.mxu0 0
    %401 = vmatmul.mubr.bf16.gmra.mrb[0].mxu0 %v315
    %v402 = vpop.f32.mrb[0].mxu0
    %v403 = vadd.f32 %v319, %v402
    %v404 = vpop.f32.mrb[0].mxu0
    %v405 = vpop.f32.mrb[0].mxu0
    %v406 = vadd.f32 %v319, %v405
    %v407 = vpop.f32.mrb[0].mxu0
    %408 = vdwg.mxu0
    %v409 = vtanh.pop %v403
    %v410 = vtanh.pop %v406
    %411 = vst [vmem:[#allocation8] sm:$0xff] %v409
    %412 = vst [vmem:[#allocation8 + $0x8] sm:$0xff] %v410
    // Predicated region
    $region18: #{tpu_custom_call.1} parent=1 // pred_check
      _
    $region19: #{tpu_custom_call.1} parent=1 // pred_check_branch
      %414 = sbr.rel (0) target = $region21
    $region20: #{tpu_custom_call.1} parent=1 // pred_region
      %s416 = ssub.s32 256, 256
      %417 = vsyncadd [#allocation5], %s416
      %s418 = sshll.u32 [#allocation8], 4
      %s419 = int_to_ptr.vmem [resolvable:$true] %s418
      %424 = dma.vmem_to_hbm [thread:$0]  %s419, 256, %s2, [#allocation5], 128, 128, 8
    $region21: #{tpu_custom_call.1} parent=1 // pred_fallthru
      _
    // Predicated region
    $region22: #{tpu_custom_call.1} parent=1 // pred_check
      _
    $region23: #{tpu_custom_call.1} parent=1 // pred_check_branch
      %426 = sbr.rel (0) target = $region25
    $region24: #{tpu_custom_call.1} parent=1 // pred_region
      %427 = dma.done [#allocation5], 256
    $region25: #{tpu_custom_call.1} parent=1 // pred_fallthru
      _
    %428 = vsyncpa [#allocation4], 1
    %429 = vsyncpa [#allocation7], 1
    %430 = vsyncpa [#allocation5], 1

</llo_original>
